<compile_context>
chip_gen: v7x
topology: tpu7x:2x2x1
jax: 0.10.0
libtpu: 0.0.40
codegen_flags: <defaults>
</compile_context>

<pallas_src>
import jax
import jax.numpy as jnp
from jax.experimental import pallas as pl
from jax.experimental.pallas import tpu as pltpu


# ----------------------------- kernel -------------------------------------- #

def _add_bias_kernel(x_ref, b_ref, o_ref):
    # x_ref: (tm, tc) tile; b_ref: (1, tc) row-bias OR (tm, 1) per-row bias.
    # Promotion to the output dtype happens here (VPU slack is huge; this
    # avoids a separate whole-tensor cast pass in HBM).
    o_ref[...] = x_ref[...].astype(o_ref.dtype) + b_ref[...].astype(o_ref.dtype)


# ----------------------------- tiling helpers ------------------------------ #

def _vmem_budget():
    """(block_bytes, vmem_limit_bytes), generation-aware."""
    try:
        cap = int(pltpu.get_tpu_info().vmem_capacity_bytes)
    except Exception:  # be conservative (v7x per-TC VMEM)
        cap = 64 * 1024 * 1024
    # Use at most half of physical VMEM for this kernel's pipelined buffers.
    vmem_limit = min(cap // 2, 64 * 1024 * 1024)
    # Live footprint ~= 2x input block + 2x output block (+ tiny bias).
    block_bytes = vmem_limit // 5
    return block_bytes, vmem_limit


def _sublane_multiple(itemsize):
    if itemsize >= 4:
        return 8
    if itemsize == 2:
        return 16
    return 32


def _choose_tiles(rows, cols, itemsize, block_bytes):
    """Pick (tm, tc) block dims: lane-dense, sublane-rounded, VMEM-bounded."""
    sub = _sublane_multiple(itemsize)
    lane = 128

    # ---- column tile: keep full width when it fits, else 128-multiple chunk.
    row_bytes = cols * itemsize
    if sub * row_bytes <= block_bytes or cols <= lane:
        tc = cols
    else:
        tc_elems = block_bytes // (sub * itemsize)
        tc = max(lane, (tc_elems // lane) * lane)
        tc = min(tc, cols)

    # ---- row tile: biggest sublane multiple fitting the block budget.
    if rows <= sub:
        tm = rows
    else:
        tm_max = max(sub, block_bytes // max(1, tc * itemsize))
        tm = min(rows, (tm_max // sub) * sub)
        if tm >= rows:
            tm = rows

    # ---- ensure >=2 grid steps when splittable (v7x megacore sharding).
    if tm >= rows and tc >= cols and rows > 2 * sub:
        half = (rows + 1) // 2
        tm_split = ((half + sub - 1) // sub) * sub
        if tm_split < rows:
            tm = tm_split
    return tm, tc


# ----------------------------- tiled add ------------------------------------ #

def _tiled_add_2d(x2d, bias2d, *, bias_is_per_row, out_dtype, donate_x=False):
    rows, cols = x2d.shape
    block_bytes, vmem_limit = _vmem_budget()
    itemsize = max(jnp.dtype(x2d.dtype).itemsize, jnp.dtype(out_dtype).itemsize)
    tm, tc = _choose_tiles(rows, cols, itemsize, block_bytes)
    grid = (pl.cdiv(rows, tm), pl.cdiv(cols, tc))

    x_spec = pl.BlockSpec((tm, tc), lambda i, j: (i, j))
    if bias_is_per_row:
        b_spec = pl.BlockSpec((tm, 1), lambda i, j: (i, 0))   # (rows, 1) bias
    else:
        b_spec = pl.BlockSpec((1, tc), lambda i, j: (0, j))   # (1, cols) bias
    out_spec = pl.BlockSpec((tm, tc), lambda i, j: (i, j))

    kwargs = {}
    # Alias x's HBM buffer for the output only when no dtype widening happens
    # (otherwise shapes/dtypes differ and the alias would be invalid).
    if donate_x and x2d.dtype == jnp.dtype(out_dtype):
        kwargs["input_output_aliases"] = {0: 0}

    return pl.pallas_call(
        _add_bias_kernel,
        out_shape=jax.ShapeDtypeStruct((rows, cols), out_dtype),
        grid=grid,
        in_specs=[x_spec, b_spec],
        out_specs=out_spec,
        compiler_params=pltpu.CompilerParams(
            dimension_semantics=("parallel", "parallel"),
            vmem_limit_bytes=vmem_limit,
        ),
        **kwargs,
    )(x2d, bias2d)


# ----------------------------- wrappers ------------------------------------ #

def add_bias_2d(x, bias_c, donate_x=False):
    """x: (N, C), bias_c: (C,) -> x + bias broadcast along rows."""
    n, c = x.shape
    out_dtype = jnp.result_type(x.dtype, bias_c.dtype)
    b = bias_c.astype(out_dtype)

    # Lane-dense repack for the tiny-C PPO case: (N, C) -> (N*C/128, 128)
    # with the bias tiled to a full 128-lane row (unmasked stores, ~32x fewer
    # grid steps than a 4-lane-wide output).
    if c < 128 and (128 % c == 0) and ((n * c) % 128 == 0):
        x2d = x.reshape((n * c) // 128, 128)
        bias_row = jnp.tile(b, 128 // c).reshape(1, 128)
        y = _tiled_add_2d(x2d, bias_row, bias_is_per_row=False,
                          out_dtype=out_dtype, donate_x=donate_x)
        return y.reshape(n, c)

    bias_row = b.reshape(1, c)
    return _tiled_add_2d(x, bias_row, bias_is_per_row=False,
                         out_dtype=out_dtype, donate_x=donate_x)


def add_bias_4d(x, bias_c, donate_x=False):
    """x: (N, C, H, W) NCHW, bias_c: (C,) -> x + bias per channel."""
    n, c, h, w = x.shape
    out_dtype = jnp.result_type(x.dtype, bias_c.dtype)
    b = bias_c.astype(out_dtype)
    hw = h * w

    if hw % 128 == 0:
        # Already lane-dense: rows = (n, c) pairs, cols = flattened H*W.
        x2d = x.reshape(n * c, hw)
        bias_col = jnp.tile(b, (n,)).reshape(n * c, 1)      # per-row bias
        y2d = _tiled_add_2d(x2d, bias_col, bias_is_per_row=True,
                            out_dtype=out_dtype, donate_x=donate_x)
    else:
        # Fold C into the lane axis so stores stay as dense as the data allows;
        # bias becomes a (1, C*H*W) row (each channel value repeated H*W times).
        x2d = x.reshape(n, c * hw)
        bias_row = jnp.repeat(b, hw).reshape(1, c * hw)
        y2d = _tiled_add_2d(x2d, bias_row, bias_is_per_row=False,
                            out_dtype=out_dtype, donate_x=donate_x)
    return y2d.reshape(n, c, h, w)


class AddBias:
    """JAX/Pallas port of the PyTorch AddBias module."""

    def __init__(self, bias_vec):
        # PyTorch stores bias.unsqueeze(1) -> shape (C, 1)
        self._bias = jnp.asarray(bias_vec).reshape(-1, 1)

    def __call__(self, x, donate_x=False):
        bias_c = self._bias[:, 0]  # (C,)
        if x.ndim == 2:
            return add_bias_2d(x, bias_c, donate_x=donate_x)
        elif x.ndim == 4:
            return add_bias_4d(x, bias_c, donate_x=donate_x)
        else:
            raise ValueError(f"AddBias expects 2D or 4D input, got ndim={x.ndim}")


# ----------------------------- demo ---------------------------------------- #

if __name__ == "__main__":
    key = jax.random.PRNGKey(0)
    k_bias, k_x2, k_x2b, k_x4 = jax.random.split(key, 4)

    C = 4
    bias_vec = jax.random.normal(k_bias, (C,), dtype=jnp.float32)
    module = AddBias(bias_vec)
    ref_bias_2d = bias_vec.reshape(1, C)
    ref_bias_4d = bias_vec.reshape(1, C, 1, 1)

    # 2D case (tiny PPO shape, no repack possible): (N, C) = (2, 4)
    x2 = jax.random.normal(k_x2, (2, C), dtype=jnp.float32)
    y2 = jax.block_until_ready(module(x2))
    ref2 = x2 + ref_bias_2d
    assert y2.shape == ref2.shape and y2.dtype == ref2.dtype
    assert jnp.allclose(y2, ref2, atol=1e-6), "2D AddBias mismatch"

    # 2D case that exercises the lane-dense repack path: (N, C) = (64, 4)
    x2b = jax.random.normal(k_x2b, (64, C), dtype=jnp.float32)
    y2b = jax.block_until_ready(module(x2b))
    ref2b = x2b + ref_bias_2d
    assert y2b.shape == ref2b.shape and y2b.dtype == ref2b.dtype
    assert jnp.allclose(y2b, ref2b, atol=1e-6), "2D (repacked) AddBias mismatch"

    # 4D case: (N, C, H, W) -- NCHW, as in PyTorch
    x4 = jax.random.normal(k_x4, (2, C, 16, 16), dtype=jnp.float32)
    y4 = jax.block_until_ready(module(x4))
    ref4 = x4 + ref_bias_4d
    assert y4.shape == ref4.shape and y4.dtype == ref4.dtype
    assert jnp.allclose(y4, ref4, atol=1e-6), "4D AddBias mismatch"

    print("KERNEL_OK")
</pallas_src>

<mosaic_0001>
module attributes {stable_mosaic.version = 11 : i64} {
  func.func @_add_bias_kernel(%arg0: i32, %arg1: i32, %arg2: memref<2x4xf32, #tpu.memory_space<vmem>>, %arg3: memref<1x4xf32, #tpu.memory_space<vmem>>, %arg4: memref<2x4xf32, #tpu.memory_space<vmem>>) attributes {dimension_semantics = [#tpu.dimension_semantics<parallel>, #tpu.dimension_semantics<parallel>], iteration_bounds = array<i64: 1, 1>, scalar_prefetch = 0 : i64, scratch_operands = 0 : i64, tpu.core_type = #tpu.core_type<tc>, window_params = [{transform_indices = @transform_0, window_bounds = array<i64: 2, 4>}, {transform_indices = @transform_1, window_bounds = array<i64: 1, 4>}, {transform_indices = @transform_2, window_bounds = array<i64: 2, 4>}]} {
    %c0 = arith.constant 0 : index
    %c0_0 = arith.constant 0 : index
    %0 = vector.load %arg2[%c0, %c0_0] : memref<2x4xf32, #tpu.memory_space<vmem>>, vector<2x4xf32>
    %c0_1 = arith.constant 0 : index
    %c0_2 = arith.constant 0 : index
    %1 = vector.load %arg3[%c0_1, %c0_2] : memref<1x4xf32, #tpu.memory_space<vmem>>, vector<1x4xf32>
    %2 = vector.broadcast %1 : vector<1x4xf32> to vector<2x4xf32>
    %3 = arith.addf %0, %2 : vector<2x4xf32>
    %c0_3 = arith.constant 0 : index
    %c0_4 = arith.constant 0 : index
    %4 = vector.load %arg4[%c0_3, %c0_4] : memref<2x4xf32, #tpu.memory_space<vmem>>, vector<2x4xf32>
    tpu.vector_store %arg4[%c0_3, %c0_4], %3 {strides = array<i32>} : memref<2x4xf32, #tpu.memory_space<vmem>>, vector<2x4xf32>,
    return
  }
  func.func @transform_0(%arg0: i32, %arg1: i32) -> (i32, i32) {
    %c0_i32 = arith.constant 0 : i32
    return %arg0, %arg1 : i32, i32
  }
  func.func @transform_1(%arg0: i32, %arg1: i32) -> (i32, i32) {
    %c0_i32 = arith.constant 0 : i32
    %c0_i32_0 = arith.constant 0 : i32
    return %c0_i32, %arg1 : i32, i32
  }
  func.func @transform_2(%arg0: i32, %arg1: i32) -> (i32, i32) {
    %c0_i32 = arith.constant 0 : i32
    return %arg0, %arg1 : i32, i32
  }
}

</mosaic_0001>

<llo_original>
// kernel: tpu_custom_call.1
$region0: #{tpu_custom_call.1}
  #allocation0 [shape = 'u32[]', space=smem, size = 0x4, offset = 0x4, fixed_abs, tag = 'smem constant byte address 0x4 - core index']
  #allocation1 [shape = 'u32[144,128]{1,0:T(1,128)}', space=vmem, size = 0x12000, scoped, tag = 'internal scratch']
  %s0 = inlined_call_operand.hbm [shape: f32[2,4], index: 0, kind: input, shape index: {}]
  %s1 = inlined_call_operand.vmem [shape: f32[1,4], index: 1, kind: input, shape index: {}]
  %s2 = inlined_call_operand.hbm [shape: f32[2,4], index: 2, kind: output, shape index: {}]
  %s3 = sld [smem:[#allocation0]]
  $region22: #{tpu_custom_call.1} parent=0
    _
  %s5 = ssub.s32 1, %s3
  %s6 = scalar_select 0, %s5, %s3
  $region1: #{tpu_custom_call.1} parent=0
    #allocation2 [shape = 'u8[1024]{0}', space=vmem, size = 0x400, scoped, tag = 'input window, operand 0, single buffered']
    #allocation3 [shape = 's32[1]{0}', space=sflag, size = 0x4, scoped, tag = 'scoped memory for tpu_custom_call.1']
    #allocation4 [shape = 's32[1]{0}', space=sflag, size = 0x4, scoped, tag = 'scoped memory for tpu_custom_call.1']
    #allocation5 [shape = 'u8[1024]{0}', space=vmem, size = 0x400, scoped, tag = 'output window, operand 0, single buffered']
    %7 = vsyncpa [#allocation3], 0
    %8 = vsyncpa [#allocation4], 0
    // Predicated region
    $region2: #{tpu_custom_call.1} parent=1 // pred_check
      _
    $region3: #{tpu_custom_call.1} parent=1 // pred_check_branch
      %10 = sbr.rel (0) target = $region5
    $region4: #{tpu_custom_call.1} parent=1 // pred_region
      %s12 = ssub.s32 32, 32
      %13 = vsyncadd [#allocation3], %s12
      %s15 = sshll.u32 [#allocation2], 4
      %s16 = int_to_ptr.vmem [resolvable:$true] %s15
      %18 = dma.hbm_to_vmem [thread:$0]  %s0, 32, %s16, [#allocation3]
    $region5: #{tpu_custom_call.1} parent=1 // pred_fallthru
      _
    // Predicated region
    $region6: #{tpu_custom_call.1} parent=1 // pred_check
      _
    $region7: #{tpu_custom_call.1} parent=1 // pred_check_branch
      %20 = sbr.rel (0) target = $region9
    $region8: #{tpu_custom_call.1} parent=1 // pred_region
      _
    $region9: #{tpu_custom_call.1} parent=1 // pred_fallthru
      _
    // Predicated region
    $region10: #{tpu_custom_call.1} parent=1 // pred_check
      _
    $region11: #{tpu_custom_call.1} parent=1 // pred_check_branch
      %22 = sbr.rel (0) target = $region13
    $region12: #{tpu_custom_call.1} parent=1 // pred_region
      %23 = dma.done [#allocation3], 32
    $region13: #{tpu_custom_call.1} parent=1 // pred_fallthru
      _
    %v24 = vld [vmem:[#allocation2] sm:$0x3]
    %v25 = vld [vmem:[%s1] sm:$0x1]
    %v27 = vlaneseq
    %v28 = vshrl.u32 %v27, 7
    %v29 = vsub.s32 0, %v28
    %v30 = vrot.slane %v25, %v29
    %v32 = vadd.f32 %v24, %v30
    %vm33 = vcmask 25600
    %34 = vst.msk [vmem:[#allocation5] sm:$0x3] %vm33, %v32
    // Predicated region
    $region14: #{tpu_custom_call.1} parent=1 // pred_check
      _
    $region15: #{tpu_custom_call.1} parent=1 // pred_check_branch
      %36 = sbr.rel (0) target = $region17
    $region16: #{tpu_custom_call.1} parent=1 // pred_region
      %s38 = ssub.s32 32, 32
      %39 = vsyncadd [#allocation4], %s38
      %s41 = sshll.u32 [#allocation5], 4
      %s42 = int_to_ptr.vmem [resolvable:$true] %s41
      %44 = dma.vmem_to_hbm [thread:$0]  %s42, 32, %s2, [#allocation4]
    $region17: #{tpu_custom_call.1} parent=1 // pred_fallthru
      _
    // Predicated region
    $region18: #{tpu_custom_call.1} parent=1 // pred_check
      _
    $region19: #{tpu_custom_call.1} parent=1 // pred_check_branch
      %46 = sbr.rel (0) target = $region21
    $region20: #{tpu_custom_call.1} parent=1 // pred_region
      %47 = dma.done [#allocation4], 32
    $region21: #{tpu_custom_call.1} parent=1 // pred_fallthru
      _
    %48 = vsyncpa [#allocation3], 1
    %49 = vsyncpa [#allocation4], 1

</llo_original>
